<compile_context>
chip_gen: v7x
topology: tpu7x:2x2x1
jax: 0.10.0
libtpu: 0.0.40
codegen_flags: <defaults>
</compile_context>

<pallas_src>
import functools

import jax
import jax.numpy as jnp
from jax import lax
from jax.experimental import pallas as pl
from jax.experimental.pallas import tpu as pltpu


# ----------------------------------------------------------------------------
# Fused Pallas kernel: embed -> dense+tanh -> mean-pool -> head -> soft CE
# ----------------------------------------------------------------------------
def _fused_forward_kernel(ids_ref, fused_ref, b1_ref, w2_ref, b2_ref,
                          labels_ref, logits_ref, loss_ref,
                          *, group_size, inv_num_groups):
    """One row-tile of examples, fully in VMEM.

    ids_ref    : [rows, S] int32    token ids (lane-dense block)
    fused_ref  : [V, H]             pre-folded  emb_table @ w1
    b1_ref     : [1, H]             encoder bias
    w2_ref     : [1, H]  b2_ref : [1, 1]    classifier head
    labels_ref : [rows, 1]          soft targets for this tile
    logits_ref : [1, rows]          per-example scores (lane-dense output)
    loss_ref   : [1, 1]             this tile's partial loss (already / num_groups)
    """
    rows, seq_len = ids_ref.shape
    vocab, hidden = fused_ref.shape
    groups = rows // group_size

    ids = ids_ref[...]                                          # (rows, S)
    fused = fused_ref[...]                                      # (V, H)
    b1 = b1_ref[...]                                            # (1, H)
    lane_iota = lax.broadcasted_iota(jnp.int32, (rows, vocab), 1)

    # Encoder + mean-pool, one sequence position at a time:
    #   h_j = tanh(one_hot(ids[:, j]) @ fused + b1)      (MXU + EUP)
    #   pooled = (1/S) * sum_j h_j                        (pooling fused into the
    # accumulation -> no [rows*S, V] one-hot, no reshape-based pooling).
    # NOTE: ids >= vocab give an all-zero one-hot (zero embedding) rather than a
    # gather fault; keep padding ids < vocab.
    # TODO(synk): for a realistic (30k+) vocab replace the one-hot MXU gather with
    # a scalar-prefetch / DMA row gather on `fused`; one-hot only pays for V<=~512.
    pooled = jnp.zeros((rows, hidden), jnp.float32)
    for j in range(seq_len):  # static unroll; roll into lax.fori_loop for long S
        onehot_j = (ids[:, j:j + 1] == lane_iota).astype(fused.dtype)  # (rows, V)
        h_j = jnp.tanh(jnp.dot(onehot_j, fused,
                               preferred_element_type=jnp.float32) + b1)
        pooled = pooled + h_j
    pooled = pooled * (1.0 / seq_len)                           # (rows, H)

    # Classifier head, produced lane-dense: scores[0, r] = <pooled[r, :], w2> + b2.
    s_row = lax.dot_general(w2_ref[...], pooled,
                            dimension_numbers=(((1,), (1,)), ((), ())),
                            preferred_element_type=jnp.float32) + b2_ref[...]
    logits_ref[...] = s_row                                     # (1, rows)

    # Soft-label cross entropy for this tile, per-group max for stability:
    #   loss_tile = sum_b [ (sum_g t[b,g]) * lse_b ] - sum_{b,g} t[b,g]*s[b,g]
    t_col = labels_ref[...]                                     # (rows, 1)
    loss = -jnp.dot(s_row, t_col, preferred_element_type=jnp.float32)   # (1, 1)
    for g in range(groups):   # static unroll; groups-per-tile kept small by chooser
        lo = g * group_size
        sb = s_row[:, lo:lo + group_size]                       # (1, G) lane slice
        tb = t_col[lo:lo + group_size, :]                       # (G, 1) sublane slice
        mb = jnp.max(sb, keepdims=True)                         # (1, 1) per-group max
        lse = mb + jnp.log(jnp.sum(jnp.exp(sb - mb), keepdims=True))
        loss = loss + jnp.sum(tb, keepdims=True) * lse
    loss_ref[...] = loss * inv_num_groups


# ----------------------------------------------------------------------------
# Tile chooser with honest VMEM accounting
# ----------------------------------------------------------------------------
def _tile_vmem_bytes(rows, seq_len, hidden, vocab):
    # Double-buffered per-tile DMA blocks: ids, labels, logits, loss.
    dbl = 2 * 4 * (rows * seq_len + rows + rows + 1)
    # Live in-kernel intermediates: per-position one-hot, h_j, pooled, scores.
    live = 4 * (rows * vocab + 3 * rows * hidden + 2 * rows)
    return dbl + live


def _resident_vmem_bytes(hidden, vocab):
    # Grid-invariant weight blocks (conservatively assume double-buffered).
    # TODO(synk): for a large fused weight on v7x (64 MiB VMEM), pass it with
    # memory_space=pl.ANY and sync_copy it once into scratch to drop the 2x buffer.
    return 2 * 4 * (vocab * hidden + 2 * hidden + 1)


def _pick_rows_per_tile(num_rows, seq_len, hidden, vocab, group_size,
                        tile_budget_bytes=16 << 20, max_rows=512):
    """Largest group- and sublane-aligned divisor of num_rows under the budget."""
    if (num_rows <= max_rows
            and _tile_vmem_bytes(num_rows, seq_len, hidden, vocab)
            <= tile_budget_bytes):
        return num_rows
    fallback = None
    for div in range(2, num_rows + 1):
        if num_rows % div:
            continue
        rows = num_rows // div
        if rows % group_size or rows % 8:
            continue
        fallback = rows                     # keeps shrinking -> smallest valid
        if (rows <= max_rows
                and _tile_vmem_bytes(rows, seq_len, hidden, vocab)
                <= tile_budget_bytes):
            return rows
    return fallback if fallback is not None else num_rows


# ----------------------------------------------------------------------------
# Wrapper
# ----------------------------------------------------------------------------
def cross_encoder_forward(params, input_ids, labels_col, group_size,
                          rows_per_tile=None, use_bf16_matmul=False):
    """Fused encoder + mean-pool + head + soft-CE forward.

    input_ids : [N, S] int32,  labels_col : [N, 1] float32 soft targets.
    Returns (logits [N, 1] float32, loss scalar float32).
    """
    n, s = input_ids.shape
    vocab, hidden = params["emb_table"].shape
    assert n % group_size == 0
    num_groups = n // group_size

    # Algebraic fold: one-hot row selection is exact, so
    # onehot @ (table @ w1) == (onehot @ table) @ w1.
    fused = jnp.dot(params["emb_table"].astype(jnp.float32),
                    params["w1"].astype(jnp.float32), precision="highest")
    if use_bf16_matmul:
        # v6e/v7x MXU-native path (loosens tolerance to ~bf16 rounding of fused).
        fused = fused.astype(jnp.bfloat16)
    b1 = params["b1"].reshape(1, hidden).astype(jnp.float32)
    w2_row = params["w2"].reshape(1, hidden).astype(jnp.float32)
    b2 = params["b2"].reshape(1, 1).astype(jnp.float32)
    ids = input_ids.astype(jnp.int32)

    if rows_per_tile is None:
        rows_per_tile = _pick_rows_per_tile(n, s, hidden, vocab, group_size)
    num_tiles = n // rows_per_tile

    kernel = functools.partial(_fused_forward_kernel, group_size=group_size,
                               inv_num_groups=1.0 / num_groups)

    vmem_need = (_resident_vmem_bytes(hidden, vocab)
                 + _tile_vmem_bytes(rows_per_tile, s, hidden, vocab))
    vmem_limit = int(min(max(int(1.5 * vmem_need) + (2 << 20), 16 << 20),
                         48 << 20))

    cost = pl.CostEstimate(
        flops=int(2 * n * s * vocab * hidden + 2 * n * hidden),
        transcendentals=int(n * s * hidden + n + num_groups),
        bytes_accessed=int(4 * (n * s + vocab * hidden + 2 * hidden + 1
                                + 2 * n + n + num_tiles)))

    logits2d, loss_parts = pl.pallas_call(
        kernel,
        out_shape=(jax.ShapeDtypeStruct((num_tiles, rows_per_tile), jnp.float32),
                   jax.ShapeDtypeStruct((num_tiles, 1), jnp.float32)),
        grid=(num_tiles,),
        in_specs=[
            pl.BlockSpec((rows_per_tile, s), lambda i: (i, 0)),   # ids (lane-dense)
            pl.BlockSpec((vocab, hidden), lambda i: (0, 0)),      # fused table@w1
            pl.BlockSpec((1, hidden), lambda i: (0, 0)),          # b1
            pl.BlockSpec((1, hidden), lambda i: (0, 0)),          # w2 row
            pl.BlockSpec((1, 1), lambda i: (0, 0)),               # b2
            pl.BlockSpec((rows_per_tile, 1), lambda i: (i, 0)),   # labels
        ],
        out_specs=(
            pl.BlockSpec((1, rows_per_tile), lambda i: (i, 0)),   # logits row
            pl.BlockSpec((1, 1), lambda i: (i, 0)),               # per-tile loss
        ),
        compiler_params=pltpu.CompilerParams(
            # Per-tile partial losses -> no resident accumulator -> the row-tile
            # axis can be parallel (v7x megacore sharding).
            dimension_semantics=("parallel",),
            vmem_limit_bytes=vmem_limit),
        cost_estimate=cost,
    )(ids, fused, b1, w2_row, b2, labels_col)

    logits = logits2d.reshape(n, 1)
    loss = jnp.sum(loss_parts)
    return logits, loss


# ----------------------------------------------------------------------------
# CrossEncoderModel equivalent
# ----------------------------------------------------------------------------
class CrossEncoderModelPallas:
    def __init__(self, params, train_group_size, per_device_batch_size):
        self.params = params
        self.train_group_size = train_group_size
        self.per_device_batch_size = per_device_batch_size
        self.training = True

    def forward(self, batch):
        batch = dict(batch)
        labels = batch.pop("labels")            # [N] float relevance
        input_ids = batch["input_ids"]          # [N, S] int32
        n = input_ids.shape[0]

        if self.training:
            group_size = self.train_group_size
            labels_col = labels.reshape(n, 1).astype(jnp.float32)
        else:
            group_size = 1                      # loss output is discarded
            labels_col = jnp.zeros((n, 1), jnp.float32)

        logits, loss = cross_encoder_forward(self.params, input_ids,
                                             labels_col, group_size)
        loss_out = loss if self.training else None
        outputs = {"logits": logits, "loss": loss_out}
        return (loss_out, outputs)

    __call__ = forward


# ----------------------------------------------------------------------------
# Pure-JAX reference for correctness checking
# ----------------------------------------------------------------------------
def _reference(params, input_ids, labels, group_size):
    n, s = input_ids.shape
    emb = params["emb_table"][input_ids].astype(jnp.float32)            # [N,S,H]
    hact = jnp.tanh(
        jnp.einsum("nsh,hk->nsk", emb, params["w1"], precision="highest")
        + params["b1"][0])                                               # [N,S,H]
    pooled = hact.mean(axis=1)                                           # [N,H]
    logits = jnp.dot(pooled, params["w2"], precision="highest") + params["b2"][0]
    b = n // group_size
    sc = logits.reshape(b, group_size)
    t = labels.reshape(b, group_size)
    lse = jax.nn.logsumexp(sc, axis=-1, keepdims=True)
    return jnp.mean(jnp.sum(t * (lse - sc), axis=-1)), logits


# ----------------------------------------------------------------------------
# Main
# ----------------------------------------------------------------------------
if __name__ == "__main__":
    # per-device batch B=2, train_group_size G=4 -> N = 8 rows, seq S=8,
    # vocab V=128, hidden H=32, num_labels=1
    B, G, S, V, H = 2, 4, 8, 128, 32
    N = B * G

    key = jax.random.PRNGKey(0)
    k_emb, k_w1, k_w2, k_ids, k_lab = jax.random.split(key, 5)

    params = {
        "emb_table": jax.random.normal(k_emb, (V, H), jnp.float32) * 0.05,
        "w1": jax.random.normal(k_w1, (H, H), jnp.float32) * 0.1,
        "b1": jnp.zeros((1, H), jnp.float32),
        "w2": jax.random.normal(k_w2, (H, 1), jnp.float32) * 0.1,
        "b2": jnp.zeros((1, 1), jnp.float32),
    }

    input_ids = jax.random.randint(k_ids, (N, S), 0, V, dtype=jnp.int32)
    # soft relevance labels per (batch, group) row, normalized within a group
    raw = jax.random.uniform(k_lab, (B, G), jnp.float32)
    labels = (raw / raw.sum(axis=-1, keepdims=True)).reshape(N)

    model = CrossEncoderModelPallas(params, train_group_size=G,
                                    per_device_batch_size=B)
    model.training = True

    loss, outputs = model({"input_ids": input_ids, "labels": labels})
    loss = jax.block_until_ready(loss)
    logits = jax.block_until_ready(outputs["logits"])

    ref_loss, ref_logits = _reference(params, input_ids, labels, G)
    assert logits.shape == (N, 1)
    assert jnp.allclose(logits, ref_logits, atol=1e-4, rtol=1e-4)
    assert jnp.allclose(loss, ref_loss, atol=1e-5, rtol=1e-5)

    print("KERNEL_OK")
</pallas_src>

<mosaic_0001>
module attributes {stable_mosaic.version = 11 : i64} {
  func.func @_fused_forward_kernel(%arg0: i32, %arg1: memref<8x8xi32, #tpu.memory_space<vmem>>, %arg2: memref<128x32xf32, #tpu.memory_space<vmem>>, %arg3: memref<1x32xf32, #tpu.memory_space<vmem>>, %arg4: memref<1x32xf32, #tpu.memory_space<vmem>>, %arg5: memref<1x1xf32, #tpu.memory_space<vmem>>, %arg6: memref<8x1xf32, #tpu.memory_space<vmem>>, %arg7: memref<1x8xf32, #tpu.memory_space<vmem>>, %arg8: memref<1x1xf32, #tpu.memory_space<vmem>>) attributes {dimension_semantics = [#tpu.dimension_semantics<parallel>], iteration_bounds = array<i64: 1>, scalar_prefetch = 0 : i64, scratch_operands = 0 : i64, tpu.core_type = #tpu.core_type<tc>, window_params = [{transform_indices = @transform_0, window_bounds = array<i64: 8, 8>}, {pipeline_mode = #tpu.pipeline_mode<synchronous>, transform_indices = @transform_1, window_bounds = array<i64: 128, 32>}, {pipeline_mode = #tpu.pipeline_mode<synchronous>, transform_indices = @transform_2, window_bounds = array<i64: 1, 32>}, {pipeline_mode = #tpu.pipeline_mode<synchronous>, transform_indices = @transform_3, window_bounds = array<i64: 1, 32>}, {pipeline_mode = #tpu.pipeline_mode<synchronous>, transform_indices = @transform_4, window_bounds = array<i64: 1, 1>}, {transform_indices = @transform_5, window_bounds = array<i64: 8, 1>}, {transform_indices = @transform_6, window_bounds = array<i64: 1, 8>}, {transform_indices = @transform_7, window_bounds = array<i64: 1, 1>}]} {
    %c0 = arith.constant 0 : index
    %c0_0 = arith.constant 0 : index
    %0 = vector.load %arg1[%c0, %c0_0] : memref<8x8xi32, #tpu.memory_space<vmem>>, vector<8x8xi32>
    %c0_1 = arith.constant 0 : index
    %c0_2 = arith.constant 0 : index
    %1 = vector.load %arg2[%c0_1, %c0_2] : memref<128x32xf32, #tpu.memory_space<vmem>>, vector<128x32xf32>
    %c0_3 = arith.constant 0 : index
    %c0_4 = arith.constant 0 : index
    %2 = vector.load %arg3[%c0_3, %c0_4] : memref<1x32xf32, #tpu.memory_space<vmem>>, vector<1x32xf32>
    %3 = tpu.iota {dimensions = array<i32: 1>} : vector<8x128xi32>
    %cst = arith.constant 0.000000e+00 : f32
    %4 = vector.broadcast %cst : f32 to vector<8x32xf32>
    %5 = vector.extract_strided_slice %0 {offsets = [0, 0], sizes = [8, 1], strides = [1, 1]} : vector<8x8xi32> to vector<8x1xi32>
    %6 = vector.broadcast %5 : vector<8x1xi32> to vector<8x128xi32>
    %7 = arith.cmpi eq, %6, %3 : vector<8x128xi32>
    %8 = arith.extui %7 : vector<8x128xi1> to vector<8x128xi32>
    %9 = arith.sitofp %8 : vector<8x128xi32> to vector<8x128xf32>
    %cst_5 = arith.constant dense<0.000000e+00> : vector<8x32xf32>
    %10 = tpu.matmul %9, %1, %cst_5 {dimension_numbers = #tpu.dot_dimension_numbers<[1], [0], [0], [1], [0, 0, 1, 1], [], []>} : vector<8x128xf32>, vector<128x32xf32>, vector<8x32xf32> -> vector<8x32xf32>
    %11 = vector.broadcast %2 : vector<1x32xf32> to vector<8x32xf32>
    %12 = arith.addf %10, %11 : vector<8x32xf32>
    %13 = math.tanh %12 : vector<8x32xf32>
    %14 = arith.addf %4, %13 : vector<8x32xf32>
    %15 = vector.extract_strided_slice %0 {offsets = [0, 1], sizes = [8, 1], strides = [1, 1]} : vector<8x8xi32> to vector<8x1xi32>
    %16 = vector.broadcast %15 : vector<8x1xi32> to vector<8x128xi32>
    %17 = arith.cmpi eq, %16, %3 : vector<8x128xi32>
    %18 = arith.extui %17 : vector<8x128xi1> to vector<8x128xi32>
    %19 = arith.sitofp %18 : vector<8x128xi32> to vector<8x128xf32>
    %cst_6 = arith.constant dense<0.000000e+00> : vector<8x32xf32>
    %20 = tpu.matmul %19, %1, %cst_6 {dimension_numbers = #tpu.dot_dimension_numbers<[1], [0], [0], [1], [0, 0, 1, 1], [], []>} : vector<8x128xf32>, vector<128x32xf32>, vector<8x32xf32> -> vector<8x32xf32>
    %21 = vector.broadcast %2 : vector<1x32xf32> to vector<8x32xf32>
    %22 = arith.addf %20, %21 : vector<8x32xf32>
    %23 = math.tanh %22 : vector<8x32xf32>
    %24 = arith.addf %14, %23 : vector<8x32xf32>
    %25 = vector.extract_strided_slice %0 {offsets = [0, 2], sizes = [8, 1], strides = [1, 1]} : vector<8x8xi32> to vector<8x1xi32>
    %26 = vector.broadcast %25 : vector<8x1xi32> to vector<8x128xi32>
    %27 = arith.cmpi eq, %26, %3 : vector<8x128xi32>
    %28 = arith.extui %27 : vector<8x128xi1> to vector<8x128xi32>
    %29 = arith.sitofp %28 : vector<8x128xi32> to vector<8x128xf32>
    %cst_7 = arith.constant dense<0.000000e+00> : vector<8x32xf32>
    %30 = tpu.matmul %29, %1, %cst_7 {dimension_numbers = #tpu.dot_dimension_numbers<[1], [0], [0], [1], [0, 0, 1, 1], [], []>} : vector<8x128xf32>, vector<128x32xf32>, vector<8x32xf32> -> vector<8x32xf32>
    %31 = vector.broadcast %2 : vector<1x32xf32> to vector<8x32xf32>
    %32 = arith.addf %30, %31 : vector<8x32xf32>
    %33 = math.tanh %32 : vector<8x32xf32>
    %34 = arith.addf %24, %33 : vector<8x32xf32>
    %35 = vector.extract_strided_slice %0 {offsets = [0, 3], sizes = [8, 1], strides = [1, 1]} : vector<8x8xi32> to vector<8x1xi32>
    %36 = vector.broadcast %35 : vector<8x1xi32> to vector<8x128xi32>
    %37 = arith.cmpi eq, %36, %3 : vector<8x128xi32>
    %38 = arith.extui %37 : vector<8x128xi1> to vector<8x128xi32>
    %39 = arith.sitofp %38 : vector<8x128xi32> to vector<8x128xf32>
    %cst_8 = arith.constant dense<0.000000e+00> : vector<8x32xf32>
    %40 = tpu.matmul %39, %1, %cst_8 {dimension_numbers = #tpu.dot_dimension_numbers<[1], [0], [0], [1], [0, 0, 1, 1], [], []>} : vector<8x128xf32>, vector<128x32xf32>, vector<8x32xf32> -> vector<8x32xf32>
    %41 = vector.broadcast %2 : vector<1x32xf32> to vector<8x32xf32>
    %42 = arith.addf %40, %41 : vector<8x32xf32>
    %43 = math.tanh %42 : vector<8x32xf32>
    %44 = arith.addf %34, %43 : vector<8x32xf32>
    %45 = vector.extract_strided_slice %0 {offsets = [0, 4], sizes = [8, 1], strides = [1, 1]} : vector<8x8xi32> to vector<8x1xi32>
    %46 = vector.broadcast %45 : vector<8x1xi32> to vector<8x128xi32>
    %47 = arith.cmpi eq, %46, %3 : vector<8x128xi32>
    %48 = arith.extui %47 : vector<8x128xi1> to vector<8x128xi32>
    %49 = arith.sitofp %48 : vector<8x128xi32> to vector<8x128xf32>
    %cst_9 = arith.constant dense<0.000000e+00> : vector<8x32xf32>
    %50 = tpu.matmul %49, %1, %cst_9 {dimension_numbers = #tpu.dot_dimension_numbers<[1], [0], [0], [1], [0, 0, 1, 1], [], []>} : vector<8x128xf32>, vector<128x32xf32>, vector<8x32xf32> -> vector<8x32xf32>
    %51 = vector.broadcast %2 : vector<1x32xf32> to vector<8x32xf32>
    %52 = arith.addf %50, %51 : vector<8x32xf32>
    %53 = math.tanh %52 : vector<8x32xf32>
    %54 = arith.addf %44, %53 : vector<8x32xf32>
    %55 = vector.extract_strided_slice %0 {offsets = [0, 5], sizes = [8, 1], strides = [1, 1]} : vector<8x8xi32> to vector<8x1xi32>
    %56 = vector.broadcast %55 : vector<8x1xi32> to vector<8x128xi32>
    %57 = arith.cmpi eq, %56, %3 : vector<8x128xi32>
    %58 = arith.extui %57 : vector<8x128xi1> to vector<8x128xi32>
    %59 = arith.sitofp %58 : vector<8x128xi32> to vector<8x128xf32>
    %cst_10 = arith.constant dense<0.000000e+00> : vector<8x32xf32>
    %60 = tpu.matmul %59, %1, %cst_10 {dimension_numbers = #tpu.dot_dimension_numbers<[1], [0], [0], [1], [0, 0, 1, 1], [], []>} : vector<8x128xf32>, vector<128x32xf32>, vector<8x32xf32> -> vector<8x32xf32>
    %61 = vector.broadcast %2 : vector<1x32xf32> to vector<8x32xf32>
    %62 = arith.addf %60, %61 : vector<8x32xf32>
    %63 = math.tanh %62 : vector<8x32xf32>
    %64 = arith.addf %54, %63 : vector<8x32xf32>
    %65 = vector.extract_strided_slice %0 {offsets = [0, 6], sizes = [8, 1], strides = [1, 1]} : vector<8x8xi32> to vector<8x1xi32>
    %66 = vector.broadcast %65 : vector<8x1xi32> to vector<8x128xi32>
    %67 = arith.cmpi eq, %66, %3 : vector<8x128xi32>
    %68 = arith.extui %67 : vector<8x128xi1> to vector<8x128xi32>
    %69 = arith.sitofp %68 : vector<8x128xi32> to vector<8x128xf32>
    %cst_11 = arith.constant dense<0.000000e+00> : vector<8x32xf32>
    %70 = tpu.matmul %69, %1, %cst_11 {dimension_numbers = #tpu.dot_dimension_numbers<[1], [0], [0], [1], [0, 0, 1, 1], [], []>} : vector<8x128xf32>, vector<128x32xf32>, vector<8x32xf32> -> vector<8x32xf32>
    %71 = vector.broadcast %2 : vector<1x32xf32> to vector<8x32xf32>
    %72 = arith.addf %70, %71 : vector<8x32xf32>
    %73 = math.tanh %72 : vector<8x32xf32>
    %74 = arith.addf %64, %73 : vector<8x32xf32>
    %75 = vector.extract_strided_slice %0 {offsets = [0, 7], sizes = [8, 1], strides = [1, 1]} : vector<8x8xi32> to vector<8x1xi32>
    %76 = vector.broadcast %75 : vector<8x1xi32> to vector<8x128xi32>
    %77 = arith.cmpi eq, %76, %3 : vector<8x128xi32>
    %78 = arith.extui %77 : vector<8x128xi1> to vector<8x128xi32>
    %79 = arith.sitofp %78 : vector<8x128xi32> to vector<8x128xf32>
    %cst_12 = arith.constant dense<0.000000e+00> : vector<8x32xf32>
    %80 = tpu.matmul %79, %1, %cst_12 {dimension_numbers = #tpu.dot_dimension_numbers<[1], [0], [0], [1], [0, 0, 1, 1], [], []>} : vector<8x128xf32>, vector<128x32xf32>, vector<8x32xf32> -> vector<8x32xf32>
    %81 = vector.broadcast %2 : vector<1x32xf32> to vector<8x32xf32>
    %82 = arith.addf %80, %81 : vector<8x32xf32>
    %83 = math.tanh %82 : vector<8x32xf32>
    %84 = arith.addf %74, %83 : vector<8x32xf32>
    %cst_13 = arith.constant 1.250000e-01 : f32
    %85 = vector.broadcast %cst_13 : f32 to vector<8x32xf32>
    %86 = arith.mulf %84, %85 : vector<8x32xf32>
    %c0_14 = arith.constant 0 : index
    %c0_15 = arith.constant 0 : index
    %87 = vector.load %arg4[%c0_14, %c0_15] : memref<1x32xf32, #tpu.memory_space<vmem>>, vector<1x32xf32>
    %cst_16 = arith.constant dense<0.000000e+00> : vector<1x8xf32>
    %88 = tpu.matmul %87, %86, %cst_16 {dimension_numbers = #tpu.dot_dimension_numbers<[1], [1], [0], [0], [0, 0, 1, 0], [], []>} : vector<1x32xf32>, vector<8x32xf32>, vector<1x8xf32> -> vector<1x8xf32>
    %c0_17 = arith.constant 0 : index
    %c0_18 = arith.constant 0 : index
    %89 = vector.load %arg5[%c0_17, %c0_18] : memref<1x1xf32, #tpu.memory_space<vmem>>, vector<1x1xf32>
    %90 = vector.broadcast %89 : vector<1x1xf32> to vector<1x8xf32>
    %91 = arith.addf %88, %90 : vector<1x8xf32>
    %c0_19 = arith.constant 0 : index
    %c0_20 = arith.constant 0 : index
    %92 = vector.load %arg7[%c0_19, %c0_20] : memref<1x8xf32, #tpu.memory_space<vmem>>, vector<1x8xf32>
    tpu.vector_store %arg7[%c0_19, %c0_20], %91 {strides = array<i32>} : memref<1x8xf32, #tpu.memory_space<vmem>>, vector<1x8xf32>,
    %c0_21 = arith.constant 0 : index
    %c0_22 = arith.constant 0 : index
    %93 = vector.load %arg6[%c0_21, %c0_22] : memref<8x1xf32, #tpu.memory_space<vmem>>, vector<8x1xf32>
    %cst_23 = arith.constant dense<0.000000e+00> : vector<1x1xf32>
    %94 = tpu.matmul %91, %93, %cst_23 {dimension_numbers = #tpu.dot_dimension_numbers<[1], [0], [0], [1], [0, 0, 1, 1], [], []>} : vector<1x8xf32>, vector<8x1xf32>, vector<1x1xf32> -> vector<1x1xf32>
    %cst_24 = arith.constant 0.000000e+00 : f32
    %95 = vector.broadcast %cst_24 : f32 to vector<1x1xf32>
    %96 = arith.subf %95, %94 : vector<1x1xf32>
    %97 = vector.extract_strided_slice %91 {offsets = [0, 0], sizes = [1, 4], strides = [1, 1]} : vector<1x8xf32> to vector<1x4xf32>
    %98 = vector.extract_strided_slice %93 {offsets = [0, 0], sizes = [4, 1], strides = [1, 1]} : vector<8x1xf32> to vector<4x1xf32>
    %99 = vector.shape_cast %97 : vector<1x4xf32> to vector<1x1x4xf32>
    %cst_25 = arith.constant dense<0xFF800000> : vector<1xf32>
    %100 = vector.multi_reduction <maximumf>, %99, %cst_25 [1, 2] : vector<1x1x4xf32> to vector<1xf32>
    %101 = vector.shape_cast %100 : vector<1xf32> to vector<1x1x1xf32>
    %102 = vector.extract %101[0, 0, 0] : f32 from vector<1x1x1xf32>
    %103 = vector.broadcast %102 : f32 to vector<1x1xf32>
    %104 = vector.broadcast %103 : vector<1x1xf32> to vector<1x4xf32>
    %105 = arith.subf %97, %104 : vector<1x4xf32>
    %106 = math.exp %105 : vector<1x4xf32>
    %107 = vector.shape_cast %106 : vector<1x4xf32> to vector<1x1x4xf32>
    %cst_26 = arith.constant dense<0.000000e+00> : vector<1xf32>
    %108 = vector.multi_reduction <add>, %107, %cst_26 [1, 2] : vector<1x1x4xf32> to vector<1xf32>
    %109 = vector.shape_cast %108 : vector<1xf32> to vector<1x1x1xf32>
    %110 = vector.extract %109[0, 0, 0] : f32 from vector<1x1x1xf32>
    %111 = vector.broadcast %110 : f32 to vector<1x1xf32>
    %112 = math.log %111 : vector<1x1xf32>
    %113 = arith.addf %103, %112 : vector<1x1xf32>
    %114 = vector.shape_cast %98 : vector<4x1xf32> to vector<1x4x1xf32>
    %cst_27 = arith.constant dense<0.000000e+00> : vector<1xf32>
    %115 = vector.multi_reduction <add>, %114, %cst_27 [1, 2] : vector<1x4x1xf32> to vector<1xf32>
    %116 = vector.shape_cast %115 : vector<1xf32> to vector<1x1x1xf32>
    %117 = vector.extract %116[0, 0, 0] : f32 from vector<1x1x1xf32>
    %118 = vector.broadcast %117 : f32 to vector<1x1xf32>
    %119 = arith.mulf %118, %113 : vector<1x1xf32>
    %120 = arith.addf %96, %119 : vector<1x1xf32>
    %121 = vector.extract_strided_slice %91 {offsets = [0, 4], sizes = [1, 4], strides = [1, 1]} : vector<1x8xf32> to vector<1x4xf32>
    %122 = vector.extract_strided_slice %93 {offsets = [4, 0], sizes = [4, 1], strides = [1, 1]} : vector<8x1xf32> to vector<4x1xf32>
    %123 = vector.shape_cast %121 : vector<1x4xf32> to vector<1x1x4xf32>
    %cst_28 = arith.constant dense<0xFF800000> : vector<1xf32>
    %124 = vector.multi_reduction <maximumf>, %123, %cst_28 [1, 2] : vector<1x1x4xf32> to vector<1xf32>
    %125 = vector.shape_cast %124 : vector<1xf32> to vector<1x1x1xf32>
    %126 = vector.extract %125[0, 0, 0] : f32 from vector<1x1x1xf32>
    %127 = vector.broadcast %126 : f32 to vector<1x1xf32>
    %128 = vector.broadcast %127 : vector<1x1xf32> to vector<1x4xf32>
    %129 = arith.subf %121, %128 : vector<1x4xf32>
    %130 = math.exp %129 : vector<1x4xf32>
    %131 = vector.shape_cast %130 : vector<1x4xf32> to vector<1x1x4xf32>
    %cst_29 = arith.constant dense<0.000000e+00> : vector<1xf32>
    %132 = vector.multi_reduction <add>, %131, %cst_29 [1, 2] : vector<1x1x4xf32> to vector<1xf32>
    %133 = vector.shape_cast %132 : vector<1xf32> to vector<1x1x1xf32>
    %134 = vector.extract %133[0, 0, 0] : f32 from vector<1x1x1xf32>
    %135 = vector.broadcast %134 : f32 to vector<1x1xf32>
    %136 = math.log %135 : vector<1x1xf32>
    %137 = arith.addf %127, %136 : vector<1x1xf32>
    %138 = vector.shape_cast %122 : vector<4x1xf32> to vector<1x4x1xf32>
    %cst_30 = arith.constant dense<0.000000e+00> : vector<1xf32>
    %139 = vector.multi_reduction <add>, %138, %cst_30 [1, 2] : vector<1x4x1xf32> to vector<1xf32>
    %140 = vector.shape_cast %139 : vector<1xf32> to vector<1x1x1xf32>
    %141 = vector.extract %140[0, 0, 0] : f32 from vector<1x1x1xf32>
    %142 = vector.broadcast %141 : f32 to vector<1x1xf32>
    %143 = arith.mulf %142, %137 : vector<1x1xf32>
    %144 = arith.addf %120, %143 : vector<1x1xf32>
    %cst_31 = arith.constant 5.000000e-01 : f32
    %145 = vector.broadcast %cst_31 : f32 to vector<1x1xf32>
    %146 = arith.mulf %144, %145 : vector<1x1xf32>
    %c0_32 = arith.constant 0 : index
    %c0_33 = arith.constant 0 : index
    %147 = vector.load %arg8[%c0_32, %c0_33] : memref<1x1xf32, #tpu.memory_space<vmem>>, vector<1x1xf32>
    tpu.vector_store %arg8[%c0_32, %c0_33], %146 {strides = array<i32>} : memref<1x1xf32, #tpu.memory_space<vmem>>, vector<1x1xf32>,
    return
  }
  func.func @transform_0(%arg0: i32) -> (i32, i32) {
    %c0_i32 = arith.constant 0 : i32
    %c0_i32_0 = arith.constant 0 : i32
    return %arg0, %c0_i32 : i32, i32
  }
  func.func @transform_1(%arg0: i32) -> (i32, i32) {
    %c0_i32 = arith.constant 0 : i32
    %c0_i32_0 = arith.constant 0 : i32
    %c0_i32_1 = arith.constant 0 : i32
    return %c0_i32, %c0_i32_0 : i32, i32
  }
  func.func @transform_2(%arg0: i32) -> (i32, i32) {
    %c0_i32 = arith.constant 0 : i32
    %c0_i32_0 = arith.constant 0 : i32
    %c0_i32_1 = arith.constant 0 : i32
    return %c0_i32, %c0_i32_0 : i32, i32
  }
  func.func @transform_3(%arg0: i32) -> (i32, i32) {
    %c0_i32 = arith.constant 0 : i32
    %c0_i32_0 = arith.constant 0 : i32
    %c0_i32_1 = arith.constant 0 : i32
    return %c0_i32, %c0_i32_0 : i32, i32
  }
  func.func @transform_4(%arg0: i32) -> (i32, i32) {
    %c0_i32 = arith.constant 0 : i32
    %c0_i32_0 = arith.constant 0 : i32
    %c0_i32_1 = arith.constant 0 : i32
    return %c0_i32, %c0_i32_0 : i32, i32
  }
  func.func @transform_5(%arg0: i32) -> (i32, i32) {
    %c0_i32 = arith.constant 0 : i32
    %c0_i32_0 = arith.constant 0 : i32
    return %arg0, %c0_i32 : i32, i32
  }
  func.func @transform_6(%arg0: i32) -> (i32, i32) {
    %c0_i32 = arith.constant 0 : i32
    %c0_i32_0 = arith.constant 0 : i32
    return %arg0, %c0_i32 : i32, i32
  }
  func.func @transform_7(%arg0: i32) -> (i32, i32) {
    %c0_i32 = arith.constant 0 : i32
    %c0_i32_0 = arith.constant 0 : i32
    return %arg0, %c0_i32 : i32, i32
  }
}

</mosaic_0001>

<llo_original>
// kernel: tpu_custom_call.1
$region0: #{tpu_custom_call.1}
  #allocation0 [shape = 'u32[]', space=smem, size = 0x4, offset = 0x4, fixed_abs, tag = 'smem constant byte address 0x4 - core index']
  #allocation1 [shape = 'u32[144,128]{1,0:T(1,128)}', space=vmem, size = 0x12000, scoped, tag = 'internal scratch']
  #allocation2 [shape = 'f32[1,1]{1,0:T(1,128)S(1)}', space=vmem, size = 0x200, scoped, tag = 'scoped memory for tpu_custom_call.1']
  %s0 = inlined_call_operand.vmem [shape: s32[8,8], index: 0, kind: input, shape index: {}]
  %s1 = inlined_call_operand.vmem [shape: f32[128,32], index: 1, kind: input, shape index: {}]
  %s2 = inlined_call_operand.vmem [shape: f32[1,32], index: 2, kind: input, shape index: {}]
  %s3 = inlined_call_operand.vmem [shape: f32[1,32], index: 3, kind: input, shape index: {}]
  %s4 = inlined_call_operand.<no memory space> [shape: f32[1,1], index: 4, kind: input, shape index: {}]
  %s5 = inlined_call_operand.vmem [shape: f32[8,1], index: 5, kind: input, shape index: {}]
  %s6 = inlined_call_operand.hbm [shape: f32[1,8], index: 6, kind: output, shape index: {0}]
  %s7 = inlined_call_operand.hbm [shape: f32[1,1], index: 7, kind: output, shape index: {1}]
  %8 = xla_tuple %s6, %s7
  %s9 = sld [smem:[#allocation0]]
  $region42: #{tpu_custom_call.1} parent=0
    _
  %s11 = ssub.s32 1, %s9
  %s12 = scalar_select 0, %s11, %s9
  %v13 = vstv %s4
  %14 = vst [vmem:[#allocation2] sm:$0x1] %v13
  $region1: #{tpu_custom_call.1} parent=0
    #allocation3 [shape = 'u8[512]{0}', space=vmem, size = 0x400, scoped, tag = 'output window, operand 0, single buffered']
    #allocation4 [shape = 's32[1]{0}', space=sflag, size = 0x4, scoped, tag = 'scoped memory for tpu_custom_call.1']
    #allocation5 [shape = 'u8[512]{0}', space=vmem, size = 0x400, scoped, tag = 'output window, operand 1, single buffered']
    #allocation6 [shape = 's32[1]{0}', space=sflag, size = 0x4, scoped, tag = 'scoped memory for tpu_custom_call.1']
    %15 = vsyncpa [#allocation4], 0
    %16 = vsyncpa [#allocation6], 0
    // Predicated region
    $region2: #{tpu_custom_call.1} parent=1 // pred_check
      _
    $region3: #{tpu_custom_call.1} parent=1 // pred_check_branch
      %18 = sbr.rel (0) target = $region5
    $region4: #{tpu_custom_call.1} parent=1 // pred_region
      _
    $region5: #{tpu_custom_call.1} parent=1 // pred_fallthru
      _
    // Predicated region
    $region6: #{tpu_custom_call.1} parent=1 // pred_check
      _
    $region7: #{tpu_custom_call.1} parent=1 // pred_check_branch
      %20 = sbr.rel (0) target = $region9
    $region8: #{tpu_custom_call.1} parent=1 // pred_region
      _
    $region9: #{tpu_custom_call.1} parent=1 // pred_fallthru
      _
    // Predicated region
    $region10: #{tpu_custom_call.1} parent=1 // pred_check
      _
    $region11: #{tpu_custom_call.1} parent=1 // pred_check_branch
      %22 = sbr.rel (0) target = $region13
    $region12: #{tpu_custom_call.1} parent=1 // pred_region
      _
    $region13: #{tpu_custom_call.1} parent=1 // pred_fallthru
      _
    // Predicated region
    $region14: #{tpu_custom_call.1} parent=1 // pred_check
      _
    $region15: #{tpu_custom_call.1} parent=1 // pred_check_branch
      %24 = sbr.rel (0) target = $region17
    $region16: #{tpu_custom_call.1} parent=1 // pred_region
      _
    $region17: #{tpu_custom_call.1} parent=1 // pred_fallthru
      _
    // Predicated region
    $region18: #{tpu_custom_call.1} parent=1 // pred_check
      _
    $region19: #{tpu_custom_call.1} parent=1 // pred_check_branch
      %26 = sbr.rel (0) target = $region21
    $region20: #{tpu_custom_call.1} parent=1 // pred_region
      _
    $region21: #{tpu_custom_call.1} parent=1 // pred_fallthru
      _
    // Predicated region
    $region22: #{tpu_custom_call.1} parent=1 // pred_check
      _
    $region23: #{tpu_custom_call.1} parent=1 // pred_check_branch
      %28 = sbr.rel (0) target = $region25
    $region24: #{tpu_custom_call.1} parent=1 // pred_region
      _
    $region25: #{tpu_custom_call.1} parent=1 // pred_fallthru
      _
    %v29 = vld [vmem:[%s0] sm:$0xff]
    %v30 = vld [vmem:[%s1] sm:$0xff]
    %v31 = vld [vmem:[%s1 + $0x8] sm:$0xff]
    %v32 = vld [vmem:[%s1 + $0x10] sm:$0xff]
    %v33 = vld [vmem:[%s1 + $0x18] sm:$0xff]
    %v34 = vld [vmem:[%s1 + $0x20] sm:$0xff]
    %v35 = vld [vmem:[%s1 + $0x28] sm:$0xff]
    %v36 = vld [vmem:[%s1 + $0x30] sm:$0xff]
    %v37 = vld [vmem:[%s1 + $0x38] sm:$0xff]
    %v38 = vld [vmem:[%s1 + $0x40] sm:$0xff]
    %v39 = vld [vmem:[%s1 + $0x48] sm:$0xff]
    %v40 = vld [vmem:[%s1 + $0x50] sm:$0xff]
    %v41 = vld [vmem:[%s1 + $0x58] sm:$0xff]
    %v42 = vld [vmem:[%s1 + $0x60] sm:$0xff]
    %v43 = vld [vmem:[%s1 + $0x68] sm:$0xff]
    %v44 = vld [vmem:[%s1 + $0x70] sm:$0xff]
    %v45 = vld [vmem:[%s1 + $0x78] sm:$0xff]
    %v46 = vld [vmem:[%s2] sm:$0x1]
    %v47 = vlaneseq
    %v48 = vand.u32 %v47, 127
    %49 = vset.pattern.permute.xlu0 0
    %50 = vperm.xlu0 %49, %v29
    %v51 = vpop.permute.xlu0 %50
    %vm52 = vcmp.eq.s32.totalorder %v51, %v48
    %v53 = vsel %vm52, 1, 0
    %v54 = vcvt.s32.f32 %v53
    %v56 = vlaneseq
    %v57 = vshrl.u32 %v56, 7
    %v58 = vsub.s32 0, %v57
    %v59 = vrot.slane %v46, %v58
    %61 = vmatprep.subr.mxu0 0.0
    %62 = vmatpush1.msra.mxu0 %v30
    %63 = vmatprep.subr.mxu0 0.0
    %64 = vmatpush1.msra.mxu0 %v31
    %65 = vmatprep.subr.mxu0 0.0
    %66 = vmatpush1.msra.mxu0 %v32
    %67 = vmatprep.subr.mxu0 0.0
    %68 = vmatpush1.msra.mxu0 %v33
    %69 = vmatprep.subr.mxu0 0.0
    %70 = vmatpush1.msra.mxu0 %v34
    %71 = vmatprep.subr.mxu0 0.0
    %72 = vmatpush1.msra.mxu0 %v35
    %73 = vmatprep.subr.mxu0 0.0
    %74 = vmatpush1.msra.mxu0 %v36
    %75 = vmatprep.subr.mxu0 0.0
    %76 = vmatpush1.msra.mxu0 %v37
    %77 = vmatprep.subr.mxu0 0.0
    %78 = vmatpush1.msra.mxu0 %v38
    %79 = vmatprep.subr.mxu0 0.0
    %80 = vmatpush1.msra.mxu0 %v39
    %81 = vmatprep.subr.mxu0 0.0
    %82 = vmatpush1.msra.mxu0 %v40
    %83 = vmatprep.subr.mxu0 0.0
    %84 = vmatpush1.msra.mxu0 %v41
    %85 = vmatprep.subr.mxu0 0.0
    %86 = vmatpush1.msra.mxu0 %v42
    %87 = vmatprep.subr.mxu0 0.0
    %88 = vmatpush1.msra.mxu0 %v43
    %89 = vmatprep.subr.mxu0 0.0
    %90 = vmatpush1.msra.mxu0 %v44
    %91 = vmatprep.subr.mxu0 0.0
    %92 = vmatpush1.msra.mxu0 %v45
    %93 = vmatprep.subr.mxu0 0.0
    %94 = vmatpush1.msra.mxu0 0.0
    %95 = vmatprep.subr.mxu0 0.0
    %96 = vmatpush1.msra.mxu0 0.0
    %97 = vmatprep.subr.mxu0 0.0
    %98 = vmatpush1.msra.mxu0 0.0
    %99 = vmatprep.subr.mxu0 0.0
    %100 = vmatpush1.msra.mxu0 0.0
    %101 = vmatprep.subr.mxu0 0.0
    %102 = vmatpush1.msra.mxu0 0.0
    %103 = vmatprep.subr.mxu0 0.0
    %104 = vmatpush1.msra.mxu0 0.0
    %105 = vmatprep.subr.mxu0 0.0
    %106 = vmatpush1.msra.mxu0 0.0
    %107 = vmatprep.subr.mxu0 0.0
    %108 = vmatpush1.msra.mxu0 0.0
    %109 = vmatprep.subr.mxu0 0.0
    %110 = vmatpush1.msra.mxu0 0.0
    %111 = vmatprep.subr.mxu0 0.0
    %112 = vmatpush1.msra.mxu0 0.0
    %113 = vmatprep.subr.mxu0 0.0
    %114 = vmatpush1.msra.mxu0 0.0
    %115 = vmatprep.subr.mxu0 0.0
    %116 = vmatpush1.msra.mxu0 0.0
    %117 = vmatprep.subr.mxu0 0.0
    %118 = vmatpush1.msra.mxu0 0.0
    %119 = vmatprep.subr.mxu0 0.0
    %120 = vmatpush1.msra.mxu0 0.0
    %121 = vmatprep.subr.mxu0 0.0
    %122 = vmatpush1.msra.mxu0 0.0
    %123 = vmatprep.subr.mxu0 0.0
    %124 = vmatpush1.msra.mxu0 0.0
    %125 = vmatprep.mubr.f32.mxu0 0.0
    %126 = vmatmul.mubr.f32.gmra.mrb[0].mxu0 %v54
    %v127 = vpop.f32.mrb[0].mxu0
    %v128 = vadd.f32 %v59, %v127
    %v129 = vpop.f32.mrb[0].mxu0
    %130 = vdwg.mxu0
    %v131 = vtanh.pop %v128
    %v132 = vadd.f32 %v131, 0.0
    %133 = vset.pattern.permute.xlu0 1
    %134 = vperm.xlu0 %133, %v29
    %v135 = vpop.permute.xlu0 %134
    %vm136 = vcmp.eq.s32.totalorder %v135, %v48
    %v137 = vsel %vm136, 1, 0
    %v138 = vcvt.s32.f32 %v137
    %139 = vmatprep.subr.mxu0 0.0
    %140 = vmatpush1.msra.mxu0 %v30
    %141 = vmatprep.subr.mxu0 0.0
    %142 = vmatpush1.msra.mxu0 %v31
    %143 = vmatprep.subr.mxu0 0.0
    %144 = vmatpush1.msra.mxu0 %v32
    %145 = vmatprep.subr.mxu0 0.0
    %146 = vmatpush1.msra.mxu0 %v33
    %147 = vmatprep.subr.mxu0 0.0
    %148 = vmatpush1.msra.mxu0 %v34
    %149 = vmatprep.subr.mxu0 0.0
    %150 = vmatpush1.msra.mxu0 %v35
    %151 = vmatprep.subr.mxu0 0.0
    %152 = vmatpush1.msra.mxu0 %v36
    %153 = vmatprep.subr.mxu0 0.0
    %154 = vmatpush1.msra.mxu0 %v37
    %155 = vmatprep.subr.mxu0 0.0
    %156 = vmatpush1.msra.mxu0 %v38
    %157 = vmatprep.subr.mxu0 0.0
    %158 = vmatpush1.msra.mxu0 %v39
    %159 = vmatprep.subr.mxu0 0.0
    %160 = vmatpush1.msra.mxu0 %v40
    %161 = vmatprep.subr.mxu0 0.0
    %162 = vmatpush1.msra.mxu0 %v41
    %163 = vmatprep.subr.mxu0 0.0
    %164 = vmatpush1.msra.mxu0 %v42
    %165 = vmatprep.subr.mxu0 0.0
    %166 = vmatpush1.msra.mxu0 %v43
    %167 = vmatprep.subr.mxu0 0.0
    %168 = vmatpush1.msra.mxu0 %v44
    %169 = vmatprep.subr.mxu0 0.0
    %170 = vmatpush1.msra.mxu0 %v45
    %171 = vmatprep.subr.mxu0 0.0
    %172 = vmatpush1.msra.mxu0 0.0
    %173 = vmatprep.subr.mxu0 0.0
    %174 = vmatpush1.msra.mxu0 0.0
    %175 = vmatprep.subr.mxu0 0.0
    %176 = vmatpush1.msra.mxu0 0.0
    %177 = vmatprep.subr.mxu0 0.0
    %178 = vmatpush1.msra.mxu0 0.0
    %179 = vmatprep.subr.mxu0 0.0
    %180 = vmatpush1.msra.mxu0 0.0
    %181 = vmatprep.subr.mxu0 0.0
    %182 = vmatpush1.msra.mxu0 0.0
    %183 = vmatprep.subr.mxu0 0.0
    %184 = vmatpush1.msra.mxu0 0.0
    %185 = vmatprep.subr.mxu0 0.0
    %186 = vmatpush1.msra.mxu0 0.0
    %187 = vmatprep.subr.mxu0 0.0
    %188 = vmatpush1.msra.mxu0 0.0
    %189 = vmatprep.subr.mxu0 0.0
    %190 = vmatpush1.msra.mxu0 0.0
    %191 = vmatprep.subr.mxu0 0.0
    %192 = vmatpush1.msra.mxu0 0.0
    %193 = vmatprep.subr.mxu0 0.0
    %194 = vmatpush1.msra.mxu0 0.0
    %195 = vmatprep.subr.mxu0 0.0
    %196 = vmatpush1.msra.mxu0 0.0
    %197 = vmatprep.subr.mxu0 0.0
    %198 = vmatpush1.msra.mxu0 0.0
    %199 = vmatprep.subr.mxu0 0.0
    %200 = vmatpush1.msra.mxu0 0.0
    %201 = vmatprep.subr.mxu0 0.0
    %202 = vmatpush1.msra.mxu0 0.0
    %203 = vmatprep.mubr.f32.mxu0 0.0
    %204 = vmatmul.mubr.f32.gmra.mrb[0].mxu0 %v138
    %v205 = vpop.f32.mrb[0].mxu0
    %v206 = vadd.f32 %v59, %v205
    %v207 = vpop.f32.mrb[0].mxu0
    %208 = vdwg.mxu0
    %v209 = vtanh.pop %v206
    %v210 = vadd.f32 %v132, %v209
    %211 = vset.pattern.permute.xlu0 2
    %212 = vperm.xlu0 %211, %v29
    %v213 = vpop.permute.xlu0 %212
    %vm214 = vcmp.eq.s32.totalorder %v213, %v48
    %v215 = vsel %vm214, 1, 0
    %v216 = vcvt.s32.f32 %v215
    %217 = vmatprep.subr.mxu0 0.0
    %218 = vmatpush1.msra.mxu0 %v30
    %219 = vmatprep.subr.mxu0 0.0
    %220 = vmatpush1.msra.mxu0 %v31
    %221 = vmatprep.subr.mxu0 0.0
    %222 = vmatpush1.msra.mxu0 %v32
    %223 = vmatprep.subr.mxu0 0.0
    %224 = vmatpush1.msra.mxu0 %v33
    %225 = vmatprep.subr.mxu0 0.0
    %226 = vmatpush1.msra.mxu0 %v34
    %227 = vmatprep.subr.mxu0 0.0
    %228 = vmatpush1.msra.mxu0 %v35
    %229 = vmatprep.subr.mxu0 0.0
    %230 = vmatpush1.msra.mxu0 %v36
    %231 = vmatprep.subr.mxu0 0.0
    %232 = vmatpush1.msra.mxu0 %v37
    %233 = vmatprep.subr.mxu0 0.0
    %234 = vmatpush1.msra.mxu0 %v38
    %235 = vmatprep.subr.mxu0 0.0
    %236 = vmatpush1.msra.mxu0 %v39
    %237 = vmatprep.subr.mxu0 0.0
    %238 = vmatpush1.msra.mxu0 %v40
    %239 = vmatprep.subr.mxu0 0.0
    %240 = vmatpush1.msra.mxu0 %v41
    %241 = vmatprep.subr.mxu0 0.0
    %242 = vmatpush1.msra.mxu0 %v42
    %243 = vmatprep.subr.mxu0 0.0
    %244 = vmatpush1.msra.mxu0 %v43
    %245 = vmatprep.subr.mxu0 0.0
    %246 = vmatpush1.msra.mxu0 %v44
    %247 = vmatprep.subr.mxu0 0.0
    %248 = vmatpush1.msra.mxu0 %v45
    %249 = vmatprep.subr.mxu0 0.0
    %250 = vmatpush1.msra.mxu0 0.0
    %251 = vmatprep.subr.mxu0 0.0
    %252 = vmatpush1.msra.mxu0 0.0
    %253 = vmatprep.subr.mxu0 0.0
    %254 = vmatpush1.msra.mxu0 0.0
    %255 = vmatprep.subr.mxu0 0.0
    %256 = vmatpush1.msra.mxu0 0.0
    %257 = vmatprep.subr.mxu0 0.0
    %258 = vmatpush1.msra.mxu0 0.0
    %259 = vmatprep.subr.mxu0 0.0
    %260 = vmatpush1.msra.mxu0 0.0
    %261 = vmatprep.subr.mxu0 0.0
    %262 = vmatpush1.msra.mxu0 0.0
    %263 = vmatprep.subr.mxu0 0.0
    %264 = vmatpush1.msra.mxu0 0.0
    %265 = vmatprep.subr.mxu0 0.0
    %266 = vmatpush1.msra.mxu0 0.0
    %267 = vmatprep.subr.mxu0 0.0
    %268 = vmatpush1.msra.mxu0 0.0
    %269 = vmatprep.subr.mxu0 0.0
    %270 = vmatpush1.msra.mxu0 0.0
    %271 = vmatprep.subr.mxu0 0.0
    %272 = vmatpush1.msra.mxu0 0.0
    %273 = vmatprep.subr.mxu0 0.0
    %274 = vmatpush1.msra.mxu0 0.0
    %275 = vmatprep.subr.mxu0 0.0
    %276 = vmatpush1.msra.mxu0 0.0
    %277 = vmatprep.subr.mxu0 0.0
    %278 = vmatpush1.msra.mxu0 0.0
    %279 = vmatprep.subr.mxu0 0.0
    %280 = vmatpush1.msra.mxu0 0.0
    %281 = vmatprep.mubr.f32.mxu0 0.0
    %282 = vmatmul.mubr.f32.gmra.mrb[0].mxu0 %v216
    %v283 = vpop.f32.mrb[0].mxu0
    %v284 = vadd.f32 %v59, %v283
    %v285 = vpop.f32.mrb[0].mxu0
    %286 = vdwg.mxu0
    %v287 = vtanh.pop %v284
    %v288 = vadd.f32 %v210, %v287
    %289 = vset.pattern.permute.xlu0 3
    %290 = vperm.xlu0 %289, %v29
    %v291 = vpop.permute.xlu0 %290
    %vm292 = vcmp.eq.s32.totalorder %v291, %v48
    %v293 = vsel %vm292, 1, 0
    %v294 = vcvt.s32.f32 %v293
    %295 = vmatprep.subr.mxu0 0.0
    %296 = vmatpush1.msra.mxu0 %v30
    %297 = vmatprep.subr.mxu0 0.0
    %298 = vmatpush1.msra.mxu0 %v31
    %299 = vmatprep.subr.mxu0 0.0
    %300 = vmatpush1.msra.mxu0 %v32
    %301 = vmatprep.subr.mxu0 0.0
    %302 = vmatpush1.msra.mxu0 %v33
    %303 = vmatprep.subr.mxu0 0.0
    %304 = vmatpush1.msra.mxu0 %v34
    %305 = vmatprep.subr.mxu0 0.0
    %306 = vmatpush1.msra.mxu0 %v35
    %307 = vmatprep.subr.mxu0 0.0
    %308 = vmatpush1.msra.mxu0 %v36
    %309 = vmatprep.subr.mxu0 0.0
    %310 = vmatpush1.msra.mxu0 %v37
    %311 = vmatprep.subr.mxu0 0.0
    %312 = vmatpush1.msra.mxu0 %v38
    %313 = vmatprep.subr.mxu0 0.0
    %314 = vmatpush1.msra.mxu0 %v39
    %315 = vmatprep.subr.mxu0 0.0
    %316 = vmatpush1.msra.mxu0 %v40
    %317 = vmatprep.subr.mxu0 0.0
    %318 = vmatpush1.msra.mxu0 %v41
    %319 = vmatprep.subr.mxu0 0.0
    %320 = vmatpush1.msra.mxu0 %v42
    %321 = vmatprep.subr.mxu0 0.0
    %322 = vmatpush1.msra.mxu0 %v43
    %323 = vmatprep.subr.mxu0 0.0
    %324 = vmatpush1.msra.mxu0 %v44
    %325 = vmatprep.subr.mxu0 0.0
    %326 = vmatpush1.msra.mxu0 %v45
    %327 = vmatprep.subr.mxu0 0.0
    %328 = vmatpush1.msra.mxu0 0.0
    %329 = vmatprep.subr.mxu0 0.0
    %330 = vmatpush1.msra.mxu0 0.0
    %331 = vmatprep.subr.mxu0 0.0
    %332 = vmatpush1.msra.mxu0 0.0
    %333 = vmatprep.subr.mxu0 0.0
    %334 = vmatpush1.msra.mxu0 0.0
    %335 = vmatprep.subr.mxu0 0.0
    %336 = vmatpush1.msra.mxu0 0.0
    %337 = vmatprep.subr.mxu0 0.0
    %338 = vmatpush1.msra.mxu0 0.0
    %339 = vmatprep.subr.mxu0 0.0
    %340 = vmatpush1.msra.mxu0 0.0
    %341 = vmatprep.subr.mxu0 0.0
    %342 = vmatpush1.msra.mxu0 0.0
    %343 = vmatprep.subr.mxu0 0.0
    %344 = vmatpush1.msra.mxu0 0.0
    %345 = vmatprep.subr.mxu0 0.0
    %346 = vmatpush1.msra.mxu0 0.0
    %347 = vmatprep.subr.mxu0 0.0
    %348 = vmatpush1.msra.mxu0 0.0
    %349 = vmatprep.subr.mxu0 0.0
    %350 = vmatpush1.msra.mxu0 0.0
    %351 = vmatprep.subr.mxu0 0.0
    %352 = vmatpush1.msra.mxu0 0.0
    %353 = vmatprep.subr.mxu0 0.0
    %354 = vmatpush1.msra.mxu0 0.0
    %355 = vmatprep.subr.mxu0 0.0
    %356 = vmatpush1.msra.mxu0 0.0
    %357 = vmatprep.subr.mxu0 0.0
    %358 = vmatpush1.msra.mxu0 0.0
    %359 = vmatprep.mubr.f32.mxu0 0.0
    %360 = vmatmul.mubr.f32.gmra.mrb[0].mxu0 %v294
    %v361 = vpop.f32.mrb[0].mxu0
    %v362 = vadd.f32 %v59, %v361
    %v363 = vpop.f32.mrb[0].mxu0
    %364 = vdwg.mxu0
    %v365 = vtanh.pop %v362
    %v366 = vadd.f32 %v288, %v365
    %367 = vset.pattern.permute.xlu0 4
    %368 = vperm.xlu0 %367, %v29
    %v369 = vpop.permute.xlu0 %368
    %vm370 = vcmp.eq.s32.totalorder %v369, %v48
    %v371 = vsel %vm370, 1, 0
    %v372 = vcvt.s32.f32 %v371
    %373 = vmatprep.subr.mxu0 0.0
    %374 = vmatpush1.msra.mxu0 %v30
    %375 = vmatprep.subr.mxu0 0.0
    %376 = vmatpush1.msra.mxu0 %v31
    %377 = vmatprep.subr.mxu0 0.0
    %378 = vmatpush1.msra.mxu0 %v32
    %379 = vmatprep.subr.mxu0 0.0
    %380 = vmatpush1.msra.mxu0 %v33
    %381 = vmatprep.subr.mxu0 0.0
    %382 = vmatpush1.msra.mxu0 %v34
    %383 = vmatprep.subr.mxu0 0.0
    %384 = vmatpush1.msra.mxu0 %v35
    %385 = vmatprep.subr.mxu0 0.0
    %386 = vmatpush1.msra.mxu0 %v36
    %387 = vmatprep.subr.mxu0 0.0
    %388 = vmatpush1.msra.mxu0 %v37
    %389 = vmatprep.subr.mxu0 0.0
    %390 = vmatpush1.msra.mxu0 %v38
    %391 = vmatprep.subr.mxu0 0.0
    %392 = vmatpush1.msra.mxu0 %v39
    %393 = vmatprep.subr.mxu0 0.0
    %394 = vmatpush1.msra.mxu0 %v40
    %395 = vmatprep.subr.mxu0 0.0
    %396 = vmatpush1.msra.mxu0 %v41
    %397 = vmatprep.subr.mxu0 0.0
    %398 = vmatpush1.msra.mxu0 %v42
    %399 = vmatprep.subr.mxu0 0.0
    %400 = vmatpush1.msra.mxu0 %v43
    %401 = vmatprep.subr.mxu0 0.0
    %402 = vmatpush1.msra.mxu0 %v44
    %403 = vmatprep.subr.mxu0 0.0
    %404 = vmatpush1.msra.mxu0 %v45
    %405 = vmatprep.subr.mxu0 0.0
    %406 = vmatpush1.msra.mxu0 0.0
    %407 = vmatprep.subr.mxu0 0.0
    %408 = vmatpush1.msra.mxu0 0.0
    %409 = vmatprep.subr.mxu0 0.0
    %410 = vmatpush1.msra.mxu0 0.0
    %411 = vmatprep.subr.mxu0 0.0
    %412 = vmatpush1.msra.mxu0 0.0
    %413 = vmatprep.subr.mxu0 0.0
    %414 = vmatpush1.msra.mxu0 0.0
    %415 = vmatprep.subr.mxu0 0.0
    %416 = vmatpush1.msra.mxu0 0.0
    %417 = vmatprep.subr.mxu0 0.0
    %418 = vmatpush1.msra.mxu0 0.0
    %419 = vmatprep.subr.mxu0 0.0
    %420 = vmatpush1.msra.mxu0 0.0
    %421 = vmatprep.subr.mxu0 0.0
    %422 = vmatpush1.msra.mxu0 0.0
    %423 = vmatprep.subr.mxu0 0.0
    %424 = vmatpush1.msra.mxu0 0.0
    %425 = vmatprep.subr.mxu0 0.0
    %426 = vmatpush1.msra.mxu0 0.0
    %427 = vmatprep.subr.mxu0 0.0
    %428 = vmatpush1.msra.mxu0 0.0
    %429 = vmatprep.subr.mxu0 0.0
    %430 = vmatpush1.msra.mxu0 0.0
    %431 = vmatprep.subr.mxu0 0.0
    %432 = vmatpush1.msra.mxu0 0.0
    %433 = vmatprep.subr.mxu0 0.0
    %434 = vmatpush1.msra.mxu0 0.0
    %435 = vmatprep.subr.mxu0 0.0
    %436 = vmatpush1.msra.mxu0 0.0
    %437 = vmatprep.mubr.f32.mxu0 0.0
    %438 = vmatmul.mubr.f32.gmra.mrb[0].mxu0 %v372
    %v439 = vpop.f32.mrb[0].mxu0
    %v440 = vadd.f32 %v59, %v439
    %v441 = vpop.f32.mrb[0].mxu0
    %442 = vdwg.mxu0
    %v443 = vtanh.pop %v440
    %v444 = vadd.f32 %v366, %v443
    %445 = vset.pattern.permute.xlu0 5
    %446 = vperm.xlu0 %445, %v29
    %v447 = vpop.permute.xlu0 %446
    %vm448 = vcmp.eq.s32.totalorder %v447, %v48
    %v449 = vsel %vm448, 1, 0
    %v450 = vcvt.s32.f32 %v449
    %451 = vmatprep.subr.mxu0 0.0
    %452 = vmatpush1.msra.mxu0 %v30
    %453 = vmatprep.subr.mxu0 0.0
    %454 = vmatpush1.msra.mxu0 %v31
    %455 = vmatprep.subr.mxu0 0.0
    %456 = vmatpush1.msra.mxu0 %v32
    %457 = vmatprep.subr.mxu0 0.0
    %458 = vmatpush1.msra.mxu0 %v33
    %459 = vmatprep.subr.mxu0 0.0
    %460 = vmatpush1.msra.mxu0 %v34
    %461 = vmatprep.subr.mxu0 0.0
    %462 = vmatpush1.msra.mxu0 %v35
    %463 = vmatprep.subr.mxu0 0.0
    %464 = vmatpush1.msra.mxu0 %v36
    %465 = vmatprep.subr.mxu0 0.0
    %466 = vmatpush1.msra.mxu0 %v37
    %467 = vmatprep.subr.mxu0 0.0
    %468 = vmatpush1.msra.mxu0 %v38
    %469 = vmatprep.subr.mxu0 0.0
    %470 = vmatpush1.msra.mxu0 %v39
    %471 = vmatprep.subr.mxu0 0.0
    %472 = vmatpush1.msra.mxu0 %v40
    %473 = vmatprep.subr.mxu0 0.0
    %474 = vmatpush1.msra.mxu0 %v41
    %475 = vmatprep.subr.mxu0 0.0
    %476 = vmatpush1.msra.mxu0 %v42
    %477 = vmatprep.subr.mxu0 0.0
    %478 = vmatpush1.msra.mxu0 %v43
    %479 = vmatprep.subr.mxu0 0.0
    %480 = vmatpush1.msra.mxu0 %v44
    %481 = vmatprep.subr.mxu0 0.0
    %482 = vmatpush1.msra.mxu0 %v45
    %483 = vmatprep.subr.mxu0 0.0
    %484 = vmatpush1.msra.mxu0 0.0
    %485 = vmatprep.subr.mxu0 0.0
    %486 = vmatpush1.msra.mxu0 0.0
    %487 = vmatprep.subr.mxu0 0.0
    %488 = vmatpush1.msra.mxu0 0.0
    %489 = vmatprep.subr.mxu0 0.0
    %490 = vmatpush1.msra.mxu0 0.0
    %491 = vmatprep.subr.mxu0 0.0
    %492 = vmatpush1.msra.mxu0 0.0
    %493 = vmatprep.subr.mxu0 0.0
    %494 = vmatpush1.msra.mxu0 0.0
    %495 = vmatprep.subr.mxu0 0.0
    %496 = vmatpush1.msra.mxu0 0.0
    %497 = vmatprep.subr.mxu0 0.0
    %498 = vmatpush1.msra.mxu0 0.0
    %499 = vmatprep.subr.mxu0 0.0
    %500 = vmatpush1.msra.mxu0 0.0
    %501 = vmatprep.subr.mxu0 0.0
    %502 = vmatpush1.msra.mxu0 0.0
    %503 = vmatprep.subr.mxu0 0.0
    %504 = vmatpush1.msra.mxu0 0.0
    %505 = vmatprep.subr.mxu0 0.0
    %506 = vmatpush1.msra.mxu0 0.0
    %507 = vmatprep.subr.mxu0 0.0
    %508 = vmatpush1.msra.mxu0 0.0
    %509 = vmatprep.subr.mxu0 0.0
    %510 = vmatpush1.msra.mxu0 0.0
    %511 = vmatprep.subr.mxu0 0.0
    %512 = vmatpush1.msra.mxu0 0.0
    %513 = vmatprep.subr.mxu0 0.0
    %514 = vmatpush1.msra.mxu0 0.0
    %515 = vmatprep.mubr.f32.mxu0 0.0
    %516 = vmatmul.mubr.f32.gmra.mrb[0].mxu0 %v450
    %v517 = vpop.f32.mrb[0].mxu0
    %v518 = vadd.f32 %v59, %v517
    %v519 = vpop.f32.mrb[0].mxu0
    %520 = vdwg.mxu0
    %v521 = vtanh.pop %v518
    %v522 = vadd.f32 %v444, %v521
    %523 = vset.pattern.permute.xlu0 6
    %524 = vperm.xlu0 %523, %v29
    %v525 = vpop.permute.xlu0 %524
    %vm526 = vcmp.eq.s32.totalorder %v525, %v48
    %v527 = vsel %vm526, 1, 0
    %v528 = vcvt.s32.f32 %v527
    %529 = vmatprep.subr.mxu0 0.0
    %530 = vmatpush1.msra.mxu0 %v30
    %531 = vmatprep.subr.mxu0 0.0
    %532 = vmatpush1.msra.mxu0 %v31
    %533 = vmatprep.subr.mxu0 0.0
    %534 = vmatpush1.msra.mxu0 %v32
    %535 = vmatprep.subr.mxu0 0.0
    %536 = vmatpush1.msra.mxu0 %v33
    %537 = vmatprep.subr.mxu0 0.0
    %538 = vmatpush1.msra.mxu0 %v34
    %539 = vmatprep.subr.mxu0 0.0
    %540 = vmatpush1.msra.mxu0 %v35
    %541 = vmatprep.subr.mxu0 0.0
    %542 = vmatpush1.msra.mxu0 %v36
    %543 = vmatprep.subr.mxu0 0.0
    %544 = vmatpush1.msra.mxu0 %v37
    %545 = vmatprep.subr.mxu0 0.0
    %546 = vmatpush1.msra.mxu0 %v38
    %547 = vmatprep.subr.mxu0 0.0
    %548 = vmatpush1.msra.mxu0 %v39
    %549 = vmatprep.subr.mxu0 0.0
    %550 = vmatpush1.msra.mxu0 %v40
    %551 = vmatprep.subr.mxu0 0.0
    %552 = vmatpush1.msra.mxu0 %v41
    %553 = vmatprep.subr.mxu0 0.0
    %554 = vmatpush1.msra.mxu0 %v42
    %555 = vmatprep.subr.mxu0 0.0
    %556 = vmatpush1.msra.mxu0 %v43
    %557 = vmatprep.subr.mxu0 0.0
    %558 = vmatpush1.msra.mxu0 %v44
    %559 = vmatprep.subr.mxu0 0.0
    %560 = vmatpush1.msra.mxu0 %v45
    %561 = vmatprep.subr.mxu0 0.0
    %562 = vmatpush1.msra.mxu0 0.0
    %563 = vmatprep.subr.mxu0 0.0
    %564 = vmatpush1.msra.mxu0 0.0
    %565 = vmatprep.subr.mxu0 0.0
    %566 = vmatpush1.msra.mxu0 0.0
    %567 = vmatprep.subr.mxu0 0.0
    %568 = vmatpush1.msra.mxu0 0.0
    %569 = vmatprep.subr.mxu0 0.0
    %570 = vmatpush1.msra.mxu0 0.0
    %571 = vmatprep.subr.mxu0 0.0
    %572 = vmatpush1.msra.mxu0 0.0
    %573 = vmatprep.subr.mxu0 0.0
    %574 = vmatpush1.msra.mxu0 0.0
    %575 = vmatprep.subr.mxu0 0.0
    %576 = vmatpush1.msra.mxu0 0.0
    %577 = vmatprep.subr.mxu0 0.0
    %578 = vmatpush1.msra.mxu0 0.0
    %579 = vmatprep.subr.mxu0 0.0
    %580 = vmatpush1.msra.mxu0 0.0
    %581 = vmatprep.subr.mxu0 0.0
    %582 = vmatpush1.msra.mxu0 0.0
    %583 = vmatprep.subr.mxu0 0.0
    %584 = vmatpush1.msra.mxu0 0.0
    %585 = vmatprep.subr.mxu0 0.0
    %586 = vmatpush1.msra.mxu0 0.0
    %587 = vmatprep.subr.mxu0 0.0
    %588 = vmatpush1.msra.mxu0 0.0
    %589 = vmatprep.subr.mxu0 0.0
    %590 = vmatpush1.msra.mxu0 0.0
    %591 = vmatprep.subr.mxu0 0.0
    %592 = vmatpush1.msra.mxu0 0.0
    %593 = vmatprep.mubr.f32.mxu0 0.0
    %594 = vmatmul.mubr.f32.gmra.mrb[0].mxu0 %v528
    %v595 = vpop.f32.mrb[0].mxu0
    %v596 = vadd.f32 %v59, %v595
    %v597 = vpop.f32.mrb[0].mxu0
    %598 = vdwg.mxu0
    %v599 = vtanh.pop %v596
    %v600 = vadd.f32 %v522, %v599
    %601 = vset.pattern.permute.xlu0 7
    %602 = vperm.xlu0 %601, %v29
    %v603 = vpop.permute.xlu0 %602
    %vm604 = vcmp.eq.s32.totalorder %v603, %v48
    %v605 = vsel %vm604, 1, 0
    %v606 = vcvt.s32.f32 %v605
    %607 = vmatprep.subr.mxu0 0.0
    %608 = vmatpush1.msra.mxu0 %v30
    %609 = vmatprep.subr.mxu0 0.0
    %610 = vmatpush1.msra.mxu0 %v31
    %611 = vmatprep.subr.mxu0 0.0
    %612 = vmatpush1.msra.mxu0 %v32
    %613 = vmatprep.subr.mxu0 0.0
    %614 = vmatpush1.msra.mxu0 %v33
    %615 = vmatprep.subr.mxu0 0.0
    %616 = vmatpush1.msra.mxu0 %v34
    %617 = vmatprep.subr.mxu0 0.0
    %618 = vmatpush1.msra.mxu0 %v35
    %619 = vmatprep.subr.mxu0 0.0
    %620 = vmatpush1.msra.mxu0 %v36
    %621 = vmatprep.subr.mxu0 0.0
    %622 = vmatpush1.msra.mxu0 %v37
    %623 = vmatprep.subr.mxu0 0.0
    %624 = vmatpush1.msra.mxu0 %v38
    %625 = vmatprep.subr.mxu0 0.0
    %626 = vmatpush1.msra.mxu0 %v39
    %627 = vmatprep.subr.mxu0 0.0
    %628 = vmatpush1.msra.mxu0 %v40
    %629 = vmatprep.subr.mxu0 0.0
    %630 = vmatpush1.msra.mxu0 %v41
    %631 = vmatprep.subr.mxu0 0.0
    %632 = vmatpush1.msra.mxu0 %v42
    %633 = vmatprep.subr.mxu0 0.0
    %634 = vmatpush1.msra.mxu0 %v43
    %635 = vmatprep.subr.mxu0 0.0
    %636 = vmatpush1.msra.mxu0 %v44
    %637 = vmatprep.subr.mxu0 0.0
    %638 = vmatpush1.msra.mxu0 %v45
    %639 = vmatprep.subr.mxu0 0.0
    %640 = vmatpush1.msra.mxu0 0.0
    %641 = vmatprep.subr.mxu0 0.0
    %642 = vmatpush1.msra.mxu0 0.0
    %643 = vmatprep.subr.mxu0 0.0
    %644 = vmatpush1.msra.mxu0 0.0
    %645 = vmatprep.subr.mxu0 0.0
    %646 = vmatpush1.msra.mxu0 0.0
    %647 = vmatprep.subr.mxu0 0.0
    %648 = vmatpush1.msra.mxu0 0.0
    %649 = vmatprep.subr.mxu0 0.0
    %650 = vmatpush1.msra.mxu0 0.0
    %651 = vmatprep.subr.mxu0 0.0
    %652 = vmatpush1.msra.mxu0 0.0
    %653 = vmatprep.subr.mxu0 0.0
    %654 = vmatpush1.msra.mxu0 0.0
    %655 = vmatprep.subr.mxu0 0.0
    %656 = vmatpush1.msra.mxu0 0.0
    %657 = vmatprep.subr.mxu0 0.0
    %658 = vmatpush1.msra.mxu0 0.0
    %659 = vmatprep.subr.mxu0 0.0
    %660 = vmatpush1.msra.mxu0 0.0
    %661 = vmatprep.subr.mxu0 0.0
    %662 = vmatpush1.msra.mxu0 0.0
    %663 = vmatprep.subr.mxu0 0.0
    %664 = vmatpush1.msra.mxu0 0.0
    %665 = vmatprep.subr.mxu0 0.0
    %666 = vmatpush1.msra.mxu0 0.0
    %667 = vmatprep.subr.mxu0 0.0
    %668 = vmatpush1.msra.mxu0 0.0
    %669 = vmatprep.subr.mxu0 0.0
    %670 = vmatpush1.msra.mxu0 0.0
    %671 = vmatprep.mubr.f32.mxu0 0.0
    %672 = vmatmul.mubr.f32.gmra.mrb[0].mxu0 %v606
    %v673 = vpop.f32.mrb[0].mxu0
    %v674 = vadd.f32 %v59, %v673
    %v675 = vpop.f32.mrb[0].mxu0
    %676 = vdwg.mxu0
    %v677 = vtanh.pop %v674
    %v678 = vadd.f32 %v600, %v677
    %v679 = vmul.f32 %v678, 0.125
    %v680 = vld [vmem:[%s3] sm:$0x1]
    %v681 = vld [vmem:[#allocation2] sm:$0x1]
    %683 = vset.pattern.permute.xlu0 0
    %684 = vperm.xlu0 %683, %v681
    %v685 = vpop.permute.xlu0 %684
    %v687 = vlaneseq
    %v688 = vshrl.u32 %v687, 7
    %v689 = vsub.s32 0, %v688
    %v690 = vrot.slane %v685, %v689
    %vm691 = vcmask 261120
    %v693 = vsel %vm691, %v680, 0
    %v696 = vsel %vm691, %v679, 0
    %698 = vmatprep.subr.mxu0 0.0
    %699 = vmatpush1.xpose.msra.mxu0 %v696
    %700 = vmatprep.subr.mxu0 0.0
    %701 = vmatpush1.xpose.msra.mxu0 0.0
    %702 = vmatprep.subr.mxu0 0.0
    %703 = vmatpush1.xpose.msra.mxu0 0.0
    %704 = vmatprep.subr.mxu0 0.0
    %705 = vmatpush1.xpose.msra.mxu0 0.0
    %706 = vmatprep.subr.mxu0 0.0
    %707 = vmatpush1.xpose.msra.mxu0 0.0
    %708 = vmatprep.subr.mxu0 0.0
    %709 = vmatpush1.xpose.msra.mxu0 0.0
    %710 = vmatprep.subr.mxu0 0.0
    %711 = vmatpush1.xpose.msra.mxu0 0.0
    %712 = vmatprep.subr.mxu0 0.0
    %713 = vmatpush1.xpose.msra.mxu0 0.0
    %714 = vmatprep.subr.mxu0 0.0
    %715 = vmatpush1.xpose.msra.mxu0 0.0
    %716 = vmatprep.subr.mxu0 0.0
    %717 = vmatpush1.xpose.msra.mxu0 0.0
    %718 = vmatprep.subr.mxu0 0.0
    %719 = vmatpush1.xpose.msra.mxu0 0.0
    %720 = vmatprep.subr.mxu0 0.0
    %721 = vmatpush1.xpose.msra.mxu0 0.0
    %722 = vmatprep.subr.mxu0 0.0
    %723 = vmatpush1.xpose.msra.mxu0 0.0
    %724 = vmatprep.subr.mxu0 0.0
    %725 = vmatpush1.xpose.msra.mxu0 0.0
    %726 = vmatprep.subr.mxu0 0.0
    %727 = vmatpush1.xpose.msra.mxu0 0.0
    %728 = vmatprep.subr.mxu0 0.0
    %729 = vmatpush1.xpose.msra.mxu0 0.0
    %730 = vmatprep.subr.mxu0 0.0
    %731 = vmatpush1.xpose.msra.mxu0 0.0
    %732 = vmatprep.subr.mxu0 0.0
    %733 = vmatpush1.xpose.msra.mxu0 0.0
    %734 = vmatprep.subr.mxu0 0.0
    %735 = vmatpush1.xpose.msra.mxu0 0.0
    %736 = vmatprep.subr.mxu0 0.0
    %737 = vmatpush1.xpose.msra.mxu0 0.0
    %738 = vmatprep.subr.mxu0 0.0
    %739 = vmatpush1.xpose.msra.mxu0 0.0
    %740 = vmatprep.subr.mxu0 0.0
    %741 = vmatpush1.xpose.msra.mxu0 0.0
    %742 = vmatprep.subr.mxu0 0.0
    %743 = vmatpush1.xpose.msra.mxu0 0.0
    %744 = vmatprep.subr.mxu0 0.0
    %745 = vmatpush1.xpose.msra.mxu0 0.0
    %746 = vmatprep.subr.mxu0 0.0
    %747 = vmatpush1.xpose.msra.mxu0 0.0
    %748 = vmatprep.subr.mxu0 0.0
    %749 = vmatpush1.xpose.msra.mxu0 0.0
    %750 = vmatprep.subr.mxu0 0.0
    %751 = vmatpush1.xpose.msra.mxu0 0.0
    %752 = vmatprep.subr.mxu0 0.0
    %753 = vmatpush1.xpose.msra.mxu0 0.0
    %754 = vmatprep.subr.mxu0 0.0
    %755 = vmatpush1.xpose.msra.mxu0 0.0
    %756 = vmatprep.subr.mxu0 0.0
    %757 = vmatpush1.xpose.msra.mxu0 0.0
    %758 = vmatprep.subr.mxu0 0.0
    %759 = vmatpush1.xpose.msra.mxu0 0.0
    %760 = vmatprep.subr.mxu0 0.0
    %761 = vmatpush1.xpose.msra.mxu0 0.0
    %762 = vmatprep.mubr.f32.mxu0 0.0
    %763 = vmatmul.mubr.f32.gmra.mrb[0].mxu0 %v693
    %v764 = vpop.f32.mrb[0].mxu0
    %v765 = vadd.f32 %v690, %v764
    %v766 = vpop.f32.mrb[0].mxu0
    %767 = vdwg.mxu0
    %vm768 = vcmask 57344
    %769 = vst.msk [vmem:[#allocation3] sm:$0x1] %vm768, %v765
    %v770 = vld [vmem:[%s5] sm:$0xff]
    %vm771 = vcmask 64512
    %v773 = vsel %vm771, %v765, 0
    %775 = vmatprep.subr.mxu0 0.0
    %776 = vmatpush1.msra.mxu0 %v770
    %777 = vmatprep.subr.mxu0 0.0
    %778 = vmatpush1.msra.mxu0 0.0
    %779 = vmatprep.subr.mxu0 0.0
    %780 = vmatpush1.msra.mxu0 0.0
    %781 = vmatprep.subr.mxu0 0.0
    %782 = vmatpush1.msra.mxu0 0.0
    %783 = vmatprep.subr.mxu0 0.0
    %784 = vmatpush1.msra.mxu0 0.0
    %785 = vmatprep.subr.mxu0 0.0
    %786 = vmatpush1.msra.mxu0 0.0
    %787 = vmatprep.subr.mxu0 0.0
    %788 = vmatpush1.msra.mxu0 0.0
    %789 = vmatprep.subr.mxu0 0.0
    %790 = vmatpush1.msra.mxu0 0.0
    %791 = vmatprep.subr.mxu0 0.0
    %792 = vmatpush1.msra.mxu0 0.0
    %793 = vmatprep.subr.mxu0 0.0
    %794 = vmatpush1.msra.mxu0 0.0
    %795 = vmatprep.subr.mxu0 0.0
    %796 = vmatpush1.msra.mxu0 0.0
    %797 = vmatprep.subr.mxu0 0.0
    %798 = vmatpush1.msra.mxu0 0.0
    %799 = vmatprep.subr.mxu0 0.0
    %800 = vmatpush1.msra.mxu0 0.0
    %801 = vmatprep.subr.mxu0 0.0
    %802 = vmatpush1.msra.mxu0 0.0
    %803 = vmatprep.subr.mxu0 0.0
    %804 = vmatpush1.msra.mxu0 0.0
    %805 = vmatprep.subr.mxu0 0.0
    %806 = vmatpush1.msra.mxu0 0.0
    %807 = vmatprep.subr.mxu0 0.0
    %808 = vmatpush1.msra.mxu0 0.0
    %809 = vmatprep.subr.mxu0 0.0
    %810 = vmatpush1.msra.mxu0 0.0
    %811 = vmatprep.subr.mxu0 0.0
    %812 = vmatpush1.msra.mxu0 0.0
    %813 = vmatprep.subr.mxu0 0.0
    %814 = vmatpush1.msra.mxu0 0.0
    %815 = vmatprep.subr.mxu0 0.0
    %816 = vmatpush1.msra.mxu0 0.0
    %817 = vmatprep.subr.mxu0 0.0
    %818 = vmatpush1.msra.mxu0 0.0
    %819 = vmatprep.subr.mxu0 0.0
    %820 = vmatpush1.msra.mxu0 0.0
    %821 = vmatprep.subr.mxu0 0.0
    %822 = vmatpush1.msra.mxu0 0.0
    %823 = vmatprep.subr.mxu0 0.0
    %824 = vmatpush1.msra.mxu0 0.0
    %825 = vmatprep.subr.mxu0 0.0
    %826 = vmatpush1.msra.mxu0 0.0
    %827 = vmatprep.subr.mxu0 0.0
    %828 = vmatpush1.msra.mxu0 0.0
    %829 = vmatprep.subr.mxu0 0.0
    %830 = vmatpush1.msra.mxu0 0.0
    %831 = vmatprep.subr.mxu0 0.0
    %832 = vmatpush1.msra.mxu0 0.0
    %833 = vmatprep.subr.mxu0 0.0
    %834 = vmatpush1.msra.mxu0 0.0
    %835 = vmatprep.subr.mxu0 0.0
    %836 = vmatpush1.msra.mxu0 0.0
    %837 = vmatprep.subr.mxu0 0.0
    %838 = vmatpush1.msra.mxu0 0.0
    %839 = vmatprep.mubr.f32.mxu0 0.0
    %840 = vmatmul.mubr.f32.gmra.mrb[0].mxu0 %v773
    %v841 = vpop.f32.mrb[0].mxu0
    %v842 = vadd.f32 0.0, %v841
    %v843 = vpop.f32.mrb[0].mxu0
    %844 = vdwg.mxu0
    %v845 = vsub.f32 0.0, %v842
    %vm846 = vcmask 24576
    %v847 = vsel %vm846, %v765, -inf
    %848 = vmax.xlane.f32.xlu0 %v847
    %v849 = vpop.xlane.xlu0 %848
    %v850 = vrot.slane %v849, 4
    %v851 = vmax.f32 %v849, %v850
    %v852 = vrot.slane %v851, 2
    %v853 = vmax.f32 %v851, %v852
    %v854 = vrot.slane %v853, 1
    %v855 = vmax.f32 %v853, %v854
    %s856 = vtos %v855
    %v857 = vstv %s856
    %v858 = vsub.f32 %v765, %v857
    %v859 = vmul.f32 %v858, 1.442695
    %v860 = vpow.pop %v859
    %v861 = vsel %vm846, %v860, 0.0
    %862 = vadd.xlane.f32.xlu0 %v861
    %v863 = vpop.xlane.xlu0 %862
    %v864 = vrot.slane %v863, 4
    %v865 = vadd.f32 %v863, %v864
    %v866 = vrot.slane %v865, 2
    %v867 = vadd.f32 %v865, %v866
    %v868 = vrot.slane %v867, 1
    %v869 = vadd.f32 %v867, %v868
    %s870 = vtos %v869
    %v871 = vstv %s870
    %v872 = vlog2.pop %v871
    %v873 = vmul.f32 %v872, 0.6931472
    %v874 = vadd.f32 %v857, %v873
    %vm875 = vcmask 3072
    %v876 = vsel %vm875, %v770, 0.0
    %877 = vadd.xlane.f32.xlu0 %v876
    %v878 = vpop.xlane.xlu0 %877
    %v879 = vrot.slane %v878, 4
    %v880 = vadd.f32 %v878, %v879
    %v881 = vrot.slane %v880, 2
    %v882 = vadd.f32 %v880, %v881
    %v883 = vrot.slane %v882, 1
    %v884 = vadd.f32 %v882, %v883
    %s885 = vtos %v884
    %v886 = vstv %s885
    %v887 = vmul.f32 %v886, %v874
    %v888 = vadd.f32 %v845, %v887
    %vm889 = vcmask 57376
    %v890 = vsel %vm889, %v765, -inf
    %891 = vmax.xlane.f32.xlu0 %v890
    %v892 = vpop.xlane.xlu0 %891
    %v893 = vrot.slane %v892, 4
    %v894 = vmax.f32 %v892, %v893
    %v895 = vrot.slane %v894, 2
    %v896 = vmax.f32 %v894, %v895
    %v897 = vrot.slane %v896, 1
    %v898 = vmax.f32 %v896, %v897
    %s899 = vtos %v898
    %v900 = vstv %s899
    %v901 = vsub.f32 %v765, %v900
    %v902 = vmul.f32 %v901, 1.442695
    %v903 = vpow.pop %v902
    %905 = vrot.lane.b32.xlu0 %v903, 124
    %v906 = vpop.permute.xlu0 %905
    %v908 = vsel %vm846, %v906, 0.0
    %909 = vadd.xlane.f32.xlu0 %v908
    %v910 = vpop.xlane.xlu0 %909
    %v911 = vrot.slane %v910, 4
    %v912 = vadd.f32 %v910, %v911
    %v913 = vrot.slane %v912, 2
    %v914 = vadd.f32 %v912, %v913
    %v915 = vrot.slane %v914, 1
    %v916 = vadd.f32 %v914, %v915
    %s917 = vtos %v916
    %v918 = vstv %s917
    %v919 = vlog2.pop %v918
    %v920 = vmul.f32 %v919, 0.6931472
    %v921 = vadd.f32 %v900, %v920
    %v923 = vrot.slane %v770, 4
    %v925 = vsel %vm875, %v923, 0.0
    %926 = vadd.xlane.f32.xlu0 %v925
    %v927 = vpop.xlane.xlu0 %926
    %v928 = vrot.slane %v927, 4
    %v929 = vadd.f32 %v927, %v928
    %v930 = vrot.slane %v929, 2
    %v931 = vadd.f32 %v929, %v930
    %v932 = vrot.slane %v931, 1
    %v933 = vadd.f32 %v931, %v932
    %s934 = vtos %v933
    %v935 = vstv %s934
    %v936 = vmul.f32 %v935, %v921
    %v937 = vadd.f32 %v888, %v936
    %v938 = vmul.f32 %v937, 0.5
    %vm939 = vcmask 0
    %940 = vst.msk [vmem:[#allocation5] sm:$0x1] %vm939, %v938
    // Predicated region
    $region26: #{tpu_custom_call.1} parent=1 // pred_check
      _
    $region27: #{tpu_custom_call.1} parent=1 // pred_check_branch
      %942 = sbr.rel (0) target = $region29
    $region28: #{tpu_custom_call.1} parent=1 // pred_region
      %s944 = ssub.s32 16, 16
      %945 = vsyncadd [#allocation4], %s944
      %s947 = sshll.u32 [#allocation3], 4
      %s948 = int_to_ptr.vmem [resolvable:$true] %s947
      %950 = dma.vmem_to_hbm [thread:$0]  %s948, 16, %s6, [#allocation4]
    $region29: #{tpu_custom_call.1} parent=1 // pred_fallthru
      _
    // Predicated region
    $region30: #{tpu_custom_call.1} parent=1 // pred_check
      _
    $region31: #{tpu_custom_call.1} parent=1 // pred_check_branch
      %952 = sbr.rel (0) target = $region33
    $region32: #{tpu_custom_call.1} parent=1 // pred_region
      %s954 = ssub.s32 16, 16
      %955 = vsyncadd [#allocation6], %s954
      %s957 = sshll.u32 [#allocation5], 4
      %s958 = int_to_ptr.vmem [resolvable:$true] %s957
      %960 = dma.vmem_to_hbm [thread:$0]  %s958, 16, %s7, [#allocation6]
    $region33: #{tpu_custom_call.1} parent=1 // pred_fallthru
      _
    // Predicated region
    $region34: #{tpu_custom_call.1} parent=1 // pred_check
      _
    $region35: #{tpu_custom_call.1} parent=1 // pred_check_branch
      %962 = sbr.rel (0) target = $region37
    $region36: #{tpu_custom_call.1} parent=1 // pred_region
      %963 = dma.done [#allocation4], 16
    $region37: #{tpu_custom_call.1} parent=1 // pred_fallthru
      _
    // Predicated region
    $region38: #{tpu_custom_call.1} parent=1 // pred_check
      _
    $region39: #{tpu_custom_call.1} parent=1 // pred_check_branch
      %965 = sbr.rel (0) target = $region41
    $region40: #{tpu_custom_call.1} parent=1 // pred_region
      %966 = dma.done [#allocation6], 16
    $region41: #{tpu_custom_call.1} parent=1 // pred_fallthru
      _
    %967 = vsyncpa [#allocation4], 1
    %968 = vsyncpa [#allocation6], 1

</llo_original>
